<compile_context>
chip_gen: v7x
topology: tpu7x:2x2x1
jax: 0.10.0
libtpu: 0.0.40
codegen_flags: <defaults>
</compile_context>

<pallas_src>
from functools import partial

import numpy as np
import jax
import jax.numpy as jnp
from jax.experimental import pallas as pl
from jax.experimental.pallas import tpu as pltpu

_LANE = 128
_SUBLANE = 8


def _round_up(x, m):
    return ((x + m - 1) // m) * m


def lstm_fc_kernel(idx_ref, table_ref, whh_ref, wfc_ref, bfc_ref, out_ref):
    """idx_ref:   (T*B_pad, 1) int32  time-major token indices (padded rows = 0)
       table_ref: (V_pad, 4H)  f32    emb @ W_ih^T + (b_ih + b_hh), gate-packed cols
       whh_ref:   (H, 4H)      f32    W_hh^T, gate k at cols [k*H, (k+1)*H)
       wfc_ref:   (H, C_pad)   f32    W_fc^T, zero-padded classes
       bfc_ref:   (1, C_pad)   f32
       out_ref:   (B_pad, C_pad) f32
    """
    tb = idx_ref.shape[0]
    b_pad = out_ref.shape[0]
    seq_len = tb // b_pad
    v_pad = table_ref.shape[0]
    hidden = whh_ref.shape[0]

    # (1) Fused embedding lookup + input projection + bias for ALL timesteps:
    #     a one-hot row-select of the precomputed table, done on the MXU.
    lane = jax.lax.broadcasted_iota(jnp.int32, (tb, v_pad), 1)
    onehot = (idx_ref[...] == lane).astype(jnp.float32)              # (T*Bp, Vp)
    xproj = jnp.dot(onehot, table_ref[...],
                    preferred_element_type=jnp.float32)              # (T*Bp, 4H)

    # (2) Serial recurrence, fully unrolled over the small static sequence length.
    #     Gates are packed into one 128-lane tile; gate k occupies lanes
    #     [k*H, (k+1)*H) in PyTorch order (i, f, g, o).
    h = jnp.zeros((b_pad, hidden), jnp.float32)
    c = jnp.zeros((b_pad, hidden), jnp.float32)
    for t in range(seq_len):
        gates = (xproj[t * b_pad:(t + 1) * b_pad, :]
                 + jnp.dot(h, whh_ref[...],
                           preferred_element_type=jnp.float32))      # (Bp, 4H)
        i_g = jax.nn.sigmoid(gates[:, 0 * hidden:1 * hidden])        # input gate
        f_g = jax.nn.sigmoid(gates[:, 1 * hidden:2 * hidden])        # forget gate
        g_g = jnp.tanh(gates[:, 2 * hidden:3 * hidden])              # cell candidate
        o_g = jax.nn.sigmoid(gates[:, 3 * hidden:4 * hidden])        # output gate
        c = f_g * c + i_g * g_g
        h = o_g * jnp.tanh(c)

    # (3) FC head epilogue; lane/sublane-dense (B_pad, C_pad) store.
    out_ref[...] = (jnp.dot(h, wfc_ref[...],
                            preferred_element_type=jnp.float32)
                    + bfc_ref[...]).astype(out_ref.dtype)


def prepare_params(params):
    """One-time re-layout of PyTorch-style params into kernel layouts (hoisted
    out of the forward so it is not re-dispatched per call)."""
    emb = params["embedding_matrix"].astype(jnp.float32)             # (V, E)
    w_ih = params["w_ih"].astype(jnp.float32)                        # (4H, E) i|f|g|o
    w_hh = params["w_hh"].astype(jnp.float32)                        # (4H, H)
    bias = (params["b_ih"] + params["b_hh"]).astype(jnp.float32)     # (4H,)
    w_fc = params["w_fc"].astype(jnp.float32)                        # (C, H)
    b_fc = params["b_fc"].astype(jnp.float32)                        # (C,)

    vocab = emb.shape[0]
    num_class, _ = w_fc.shape
    v_pad = _round_up(vocab, _SUBLANE)
    c_pad = _round_up(num_class, _LANE)

    # Fold embedding + input projection + fused bias: table[v] = emb[v] @ W_ih^T + b.
    table = emb @ w_ih.T + bias[None, :]                             # (V, 4H)
    table = jnp.pad(table, ((0, v_pad - vocab), (0, 0)))             # (Vp, 4H)

    whh_t = w_hh.T                                                   # (H, 4H)
    wfc_t = jnp.pad(w_fc.T, ((0, 0), (0, c_pad - num_class)))        # (H, Cp)
    bfc = jnp.pad(b_fc, (0, c_pad - num_class))[None, :]             # (1, Cp)

    return {"table": table, "whh_t": whh_t, "wfc_t": wfc_t, "bfc": bfc}


@partial(jax.jit, static_argnames=("num_class",))
def my_model_forward(input_idx, prepped, *, num_class):
    """input_idx: (B, T) int32 token indices -> (B, num_class) float32."""
    batch, seq_len = input_idx.shape
    b_pad = _round_up(batch, _SUBLANE)
    c_pad = prepped["bfc"].shape[1]

    # Time-major indices; padded batch rows reuse token 0 (their outputs are
    # row-independent in the recurrence and sliced away at the end).
    idx_tm = jnp.pad(input_idx.T.astype(jnp.int32), ((0, 0), (0, b_pad - batch)))
    idx_flat = idx_tm.reshape(seq_len * b_pad, 1)                    # (T*Bp, 1)

    out_pad = pl.pallas_call(
        lstm_fc_kernel,
        out_shape=jax.ShapeDtypeStruct((b_pad, c_pad), jnp.float32),
        in_specs=[pl.BlockSpec(memory_space=pltpu.MemorySpace.VMEM)] * 5,
        out_specs=pl.BlockSpec(memory_space=pltpu.MemorySpace.VMEM),
    )(idx_flat, prepped["table"], prepped["whh_t"], prepped["wfc_t"],
      prepped["bfc"])

    return out_pad[:batch, :num_class]


def init_params(key, vocal_size, embedding_dim, hidden_dim, num_class):
    ks = jax.random.split(key, 7)
    scale = 1.0 / jnp.sqrt(hidden_dim)
    return {
        "embedding_matrix": jax.random.normal(
            ks[0], (vocal_size, embedding_dim), jnp.float32),
        "w_ih": jax.random.uniform(
            ks[1], (4 * hidden_dim, embedding_dim), jnp.float32, -scale, scale),
        "w_hh": jax.random.uniform(
            ks[2], (4 * hidden_dim, hidden_dim), jnp.float32, -scale, scale),
        "b_ih": jax.random.uniform(
            ks[3], (4 * hidden_dim,), jnp.float32, -scale, scale),
        "b_hh": jax.random.uniform(
            ks[4], (4 * hidden_dim,), jnp.float32, -scale, scale),
        "w_fc": jax.random.uniform(
            ks[5], (num_class, hidden_dim), jnp.float32, -scale, scale),
        "b_fc": jax.random.uniform(
            ks[6], (num_class,), jnp.float32, -scale, scale),
    }


def _reference_forward(input_idx, params):
    """Pure-JAX reference matching the PyTorch module (for a correctness check)."""
    emb = params["embedding_matrix"]
    w_ih, w_hh = params["w_ih"], params["w_hh"]
    b = params["b_ih"] + params["b_hh"]
    w_fc, b_fc = params["w_fc"], params["b_fc"]
    hidden = w_hh.shape[1]

    x = emb[input_idx]                                               # (B, T, E)
    batch, seq_len, _ = x.shape
    h = jnp.zeros((batch, hidden), jnp.float32)
    c = jnp.zeros((batch, hidden), jnp.float32)
    for t in range(seq_len):
        g = x[:, t, :] @ w_ih.T + h @ w_hh.T + b
        i = jax.nn.sigmoid(g[:, 0 * hidden:1 * hidden])
        f = jax.nn.sigmoid(g[:, 1 * hidden:2 * hidden])
        gg = jnp.tanh(g[:, 2 * hidden:3 * hidden])
        o = jax.nn.sigmoid(g[:, 3 * hidden:4 * hidden])
        c = f * c + i * gg
        h = o * jnp.tanh(c)
    return h @ w_fc.T + b_fc


if __name__ == "__main__":
    # Small shapes consistent with the module.
    vocal_size = 30
    embedding_dim = 10
    hidden_dim = 32
    num_class = 5
    batch = 2
    seq_len = 8

    key = jax.random.PRNGKey(0)
    k_params, k_idx = jax.random.split(key)
    params = init_params(k_params, vocal_size, embedding_dim, hidden_dim,
                         num_class)
    input_idx = jax.random.randint(k_idx, (batch, seq_len), 0, vocal_size,
                                   dtype=jnp.int32)

    prepped = prepare_params(params)        # one-time weight re-layout (hoisted)
    out = my_model_forward(input_idx, prepped, num_class=num_class)
    jax.block_until_ready(out)
    assert out.shape == (batch, num_class)

    ref = _reference_forward(input_idx, params)
    assert np.allclose(np.asarray(out), np.asarray(ref), rtol=1e-3, atol=1e-4), \
        float(np.max(np.abs(np.asarray(out) - np.asarray(ref))))
    print("KERNEL_OK")
</pallas_src>

<mosaic_0001>
module attributes {stable_mosaic.version = 11 : i64} {
  func.func @lstm_fc_kernel(%arg0: memref<64x1xi32, #tpu.memory_space<vmem>>, %arg1: memref<32x128xf32, #tpu.memory_space<vmem>>, %arg2: memref<32x128xf32, #tpu.memory_space<vmem>>, %arg3: memref<32x128xf32, #tpu.memory_space<vmem>>, %arg4: memref<1x128xf32, #tpu.memory_space<vmem>>, %arg5: memref<8x128xf32, #tpu.memory_space<vmem>>) attributes {dimension_semantics = [], scalar_prefetch = 0 : i64, scratch_operands = 0 : i64, tpu.core_type = #tpu.core_type<tc>} {
    %0 = tpu.iota {dimensions = array<i32: 1>} : vector<64x32xi32>
    %c0 = arith.constant 0 : index
    %c0_0 = arith.constant 0 : index
    %1 = vector.load %arg0[%c0, %c0_0] : memref<64x1xi32, #tpu.memory_space<vmem>>, vector<64x1xi32>
    %2 = vector.broadcast %1 : vector<64x1xi32> to vector<64x32xi32>
    %3 = arith.cmpi eq, %2, %0 : vector<64x32xi32>
    %4 = arith.extui %3 : vector<64x32xi1> to vector<64x32xi32>
    %5 = arith.sitofp %4 : vector<64x32xi32> to vector<64x32xf32>
    %c0_1 = arith.constant 0 : index
    %c0_2 = arith.constant 0 : index
    %6 = vector.load %arg1[%c0_1, %c0_2] : memref<32x128xf32, #tpu.memory_space<vmem>>, vector<32x128xf32>
    %cst = arith.constant dense<0.000000e+00> : vector<64x128xf32>
    %7 = tpu.matmul %5, %6, %cst {dimension_numbers = #tpu.dot_dimension_numbers<[1], [0], [0], [1], [0, 0, 1, 1], [], []>} : vector<64x32xf32>, vector<32x128xf32>, vector<64x128xf32> -> vector<64x128xf32>
    %cst_3 = arith.constant 0.000000e+00 : f32
    %8 = vector.broadcast %cst_3 : f32 to vector<8x32xf32>
    %cst_4 = arith.constant 0.000000e+00 : f32
    %9 = vector.broadcast %cst_4 : f32 to vector<8x32xf32>
    %10 = vector.extract_strided_slice %7 {offsets = [0, 0], sizes = [8, 128], strides = [1, 1]} : vector<64x128xf32> to vector<8x128xf32>
    %c0_5 = arith.constant 0 : index
    %c0_6 = arith.constant 0 : index
    %11 = vector.load %arg2[%c0_5, %c0_6] : memref<32x128xf32, #tpu.memory_space<vmem>>, vector<32x128xf32>
    %cst_7 = arith.constant dense<0.000000e+00> : vector<8x128xf32>
    %12 = tpu.matmul %8, %11, %cst_7 {dimension_numbers = #tpu.dot_dimension_numbers<[1], [0], [0], [1], [0, 0, 1, 1], [], []>} : vector<8x32xf32>, vector<32x128xf32>, vector<8x128xf32> -> vector<8x128xf32>
    %13 = arith.addf %10, %12 : vector<8x128xf32>
    %14 = vector.extract_strided_slice %13 {offsets = [0, 0], sizes = [8, 32], strides = [1, 1]} : vector<8x128xf32> to vector<8x32xf32>
    %15 = arith.negf %14 : vector<8x32xf32>
    %16 = math.exp %15 : vector<8x32xf32>
    %cst_8 = arith.constant 1.000000e+00 : f32
    %17 = vector.broadcast %cst_8 : f32 to vector<8x32xf32>
    %18 = arith.addf %17, %16 : vector<8x32xf32>
    %19 = arith.divf %17, %18 : vector<8x32xf32>
    %20 = vector.extract_strided_slice %13 {offsets = [0, 32], sizes = [8, 32], strides = [1, 1]} : vector<8x128xf32> to vector<8x32xf32>
    %21 = arith.negf %20 : vector<8x32xf32>
    %22 = math.exp %21 : vector<8x32xf32>
    %cst_9 = arith.constant 1.000000e+00 : f32
    %23 = vector.broadcast %cst_9 : f32 to vector<8x32xf32>
    %24 = arith.addf %23, %22 : vector<8x32xf32>
    %25 = arith.divf %23, %24 : vector<8x32xf32>
    %26 = vector.extract_strided_slice %13 {offsets = [0, 64], sizes = [8, 32], strides = [1, 1]} : vector<8x128xf32> to vector<8x32xf32>
    %27 = math.tanh %26 : vector<8x32xf32>
    %28 = vector.extract_strided_slice %13 {offsets = [0, 96], sizes = [8, 32], strides = [1, 1]} : vector<8x128xf32> to vector<8x32xf32>
    %29 = arith.negf %28 : vector<8x32xf32>
    %30 = math.exp %29 : vector<8x32xf32>
    %cst_10 = arith.constant 1.000000e+00 : f32
    %31 = vector.broadcast %cst_10 : f32 to vector<8x32xf32>
    %32 = arith.addf %31, %30 : vector<8x32xf32>
    %33 = arith.divf %31, %32 : vector<8x32xf32>
    %34 = arith.mulf %25, %9 : vector<8x32xf32>
    %35 = arith.mulf %19, %27 : vector<8x32xf32>
    %36 = arith.addf %34, %35 : vector<8x32xf32>
    %37 = math.tanh %36 : vector<8x32xf32>
    %38 = arith.mulf %33, %37 : vector<8x32xf32>
    %39 = vector.extract_strided_slice %7 {offsets = [8, 0], sizes = [8, 128], strides = [1, 1]} : vector<64x128xf32> to vector<8x128xf32>
    %c0_11 = arith.constant 0 : index
    %c0_12 = arith.constant 0 : index
    %40 = vector.load %arg2[%c0_11, %c0_12] : memref<32x128xf32, #tpu.memory_space<vmem>>, vector<32x128xf32>
    %cst_13 = arith.constant dense<0.000000e+00> : vector<8x128xf32>
    %41 = tpu.matmul %38, %40, %cst_13 {dimension_numbers = #tpu.dot_dimension_numbers<[1], [0], [0], [1], [0, 0, 1, 1], [], []>} : vector<8x32xf32>, vector<32x128xf32>, vector<8x128xf32> -> vector<8x128xf32>
    %42 = arith.addf %39, %41 : vector<8x128xf32>
    %43 = vector.extract_strided_slice %42 {offsets = [0, 0], sizes = [8, 32], strides = [1, 1]} : vector<8x128xf32> to vector<8x32xf32>
    %44 = arith.negf %43 : vector<8x32xf32>
    %45 = math.exp %44 : vector<8x32xf32>
    %cst_14 = arith.constant 1.000000e+00 : f32
    %46 = vector.broadcast %cst_14 : f32 to vector<8x32xf32>
    %47 = arith.addf %46, %45 : vector<8x32xf32>
    %48 = arith.divf %46, %47 : vector<8x32xf32>
    %49 = vector.extract_strided_slice %42 {offsets = [0, 32], sizes = [8, 32], strides = [1, 1]} : vector<8x128xf32> to vector<8x32xf32>
    %50 = arith.negf %49 : vector<8x32xf32>
    %51 = math.exp %50 : vector<8x32xf32>
    %cst_15 = arith.constant 1.000000e+00 : f32
    %52 = vector.broadcast %cst_15 : f32 to vector<8x32xf32>
    %53 = arith.addf %52, %51 : vector<8x32xf32>
    %54 = arith.divf %52, %53 : vector<8x32xf32>
    %55 = vector.extract_strided_slice %42 {offsets = [0, 64], sizes = [8, 32], strides = [1, 1]} : vector<8x128xf32> to vector<8x32xf32>
    %56 = math.tanh %55 : vector<8x32xf32>
    %57 = vector.extract_strided_slice %42 {offsets = [0, 96], sizes = [8, 32], strides = [1, 1]} : vector<8x128xf32> to vector<8x32xf32>
    %58 = arith.negf %57 : vector<8x32xf32>
    %59 = math.exp %58 : vector<8x32xf32>
    %cst_16 = arith.constant 1.000000e+00 : f32
    %60 = vector.broadcast %cst_16 : f32 to vector<8x32xf32>
    %61 = arith.addf %60, %59 : vector<8x32xf32>
    %62 = arith.divf %60, %61 : vector<8x32xf32>
    %63 = arith.mulf %54, %36 : vector<8x32xf32>
    %64 = arith.mulf %48, %56 : vector<8x32xf32>
    %65 = arith.addf %63, %64 : vector<8x32xf32>
    %66 = math.tanh %65 : vector<8x32xf32>
    %67 = arith.mulf %62, %66 : vector<8x32xf32>
    %68 = vector.extract_strided_slice %7 {offsets = [16, 0], sizes = [8, 128], strides = [1, 1]} : vector<64x128xf32> to vector<8x128xf32>
    %c0_17 = arith.constant 0 : index
    %c0_18 = arith.constant 0 : index
    %69 = vector.load %arg2[%c0_17, %c0_18] : memref<32x128xf32, #tpu.memory_space<vmem>>, vector<32x128xf32>
    %cst_19 = arith.constant dense<0.000000e+00> : vector<8x128xf32>
    %70 = tpu.matmul %67, %69, %cst_19 {dimension_numbers = #tpu.dot_dimension_numbers<[1], [0], [0], [1], [0, 0, 1, 1], [], []>} : vector<8x32xf32>, vector<32x128xf32>, vector<8x128xf32> -> vector<8x128xf32>
    %71 = arith.addf %68, %70 : vector<8x128xf32>
    %72 = vector.extract_strided_slice %71 {offsets = [0, 0], sizes = [8, 32], strides = [1, 1]} : vector<8x128xf32> to vector<8x32xf32>
    %73 = arith.negf %72 : vector<8x32xf32>
    %74 = math.exp %73 : vector<8x32xf32>
    %cst_20 = arith.constant 1.000000e+00 : f32
    %75 = vector.broadcast %cst_20 : f32 to vector<8x32xf32>
    %76 = arith.addf %75, %74 : vector<8x32xf32>
    %77 = arith.divf %75, %76 : vector<8x32xf32>
    %78 = vector.extract_strided_slice %71 {offsets = [0, 32], sizes = [8, 32], strides = [1, 1]} : vector<8x128xf32> to vector<8x32xf32>
    %79 = arith.negf %78 : vector<8x32xf32>
    %80 = math.exp %79 : vector<8x32xf32>
    %cst_21 = arith.constant 1.000000e+00 : f32
    %81 = vector.broadcast %cst_21 : f32 to vector<8x32xf32>
    %82 = arith.addf %81, %80 : vector<8x32xf32>
    %83 = arith.divf %81, %82 : vector<8x32xf32>
    %84 = vector.extract_strided_slice %71 {offsets = [0, 64], sizes = [8, 32], strides = [1, 1]} : vector<8x128xf32> to vector<8x32xf32>
    %85 = math.tanh %84 : vector<8x32xf32>
    %86 = vector.extract_strided_slice %71 {offsets = [0, 96], sizes = [8, 32], strides = [1, 1]} : vector<8x128xf32> to vector<8x32xf32>
    %87 = arith.negf %86 : vector<8x32xf32>
    %88 = math.exp %87 : vector<8x32xf32>
    %cst_22 = arith.constant 1.000000e+00 : f32
    %89 = vector.broadcast %cst_22 : f32 to vector<8x32xf32>
    %90 = arith.addf %89, %88 : vector<8x32xf32>
    %91 = arith.divf %89, %90 : vector<8x32xf32>
    %92 = arith.mulf %83, %65 : vector<8x32xf32>
    %93 = arith.mulf %77, %85 : vector<8x32xf32>
    %94 = arith.addf %92, %93 : vector<8x32xf32>
    %95 = math.tanh %94 : vector<8x32xf32>
    %96 = arith.mulf %91, %95 : vector<8x32xf32>
    %97 = vector.extract_strided_slice %7 {offsets = [24, 0], sizes = [8, 128], strides = [1, 1]} : vector<64x128xf32> to vector<8x128xf32>
    %c0_23 = arith.constant 0 : index
    %c0_24 = arith.constant 0 : index
    %98 = vector.load %arg2[%c0_23, %c0_24] : memref<32x128xf32, #tpu.memory_space<vmem>>, vector<32x128xf32>
    %cst_25 = arith.constant dense<0.000000e+00> : vector<8x128xf32>
    %99 = tpu.matmul %96, %98, %cst_25 {dimension_numbers = #tpu.dot_dimension_numbers<[1], [0], [0], [1], [0, 0, 1, 1], [], []>} : vector<8x32xf32>, vector<32x128xf32>, vector<8x128xf32> -> vector<8x128xf32>
    %100 = arith.addf %97, %99 : vector<8x128xf32>
    %101 = vector.extract_strided_slice %100 {offsets = [0, 0], sizes = [8, 32], strides = [1, 1]} : vector<8x128xf32> to vector<8x32xf32>
    %102 = arith.negf %101 : vector<8x32xf32>
    %103 = math.exp %102 : vector<8x32xf32>
    %cst_26 = arith.constant 1.000000e+00 : f32
    %104 = vector.broadcast %cst_26 : f32 to vector<8x32xf32>
    %105 = arith.addf %104, %103 : vector<8x32xf32>
    %106 = arith.divf %104, %105 : vector<8x32xf32>
    %107 = vector.extract_strided_slice %100 {offsets = [0, 32], sizes = [8, 32], strides = [1, 1]} : vector<8x128xf32> to vector<8x32xf32>
    %108 = arith.negf %107 : vector<8x32xf32>
    %109 = math.exp %108 : vector<8x32xf32>
    %cst_27 = arith.constant 1.000000e+00 : f32
    %110 = vector.broadcast %cst_27 : f32 to vector<8x32xf32>
    %111 = arith.addf %110, %109 : vector<8x32xf32>
    %112 = arith.divf %110, %111 : vector<8x32xf32>
    %113 = vector.extract_strided_slice %100 {offsets = [0, 64], sizes = [8, 32], strides = [1, 1]} : vector<8x128xf32> to vector<8x32xf32>
    %114 = math.tanh %113 : vector<8x32xf32>
    %115 = vector.extract_strided_slice %100 {offsets = [0, 96], sizes = [8, 32], strides = [1, 1]} : vector<8x128xf32> to vector<8x32xf32>
    %116 = arith.negf %115 : vector<8x32xf32>
    %117 = math.exp %116 : vector<8x32xf32>
    %cst_28 = arith.constant 1.000000e+00 : f32
    %118 = vector.broadcast %cst_28 : f32 to vector<8x32xf32>
    %119 = arith.addf %118, %117 : vector<8x32xf32>
    %120 = arith.divf %118, %119 : vector<8x32xf32>
    %121 = arith.mulf %112, %94 : vector<8x32xf32>
    %122 = arith.mulf %106, %114 : vector<8x32xf32>
    %123 = arith.addf %121, %122 : vector<8x32xf32>
    %124 = math.tanh %123 : vector<8x32xf32>
    %125 = arith.mulf %120, %124 : vector<8x32xf32>
    %126 = vector.extract_strided_slice %7 {offsets = [32, 0], sizes = [8, 128], strides = [1, 1]} : vector<64x128xf32> to vector<8x128xf32>
    %c0_29 = arith.constant 0 : index
    %c0_30 = arith.constant 0 : index
    %127 = vector.load %arg2[%c0_29, %c0_30] : memref<32x128xf32, #tpu.memory_space<vmem>>, vector<32x128xf32>
    %cst_31 = arith.constant dense<0.000000e+00> : vector<8x128xf32>
    %128 = tpu.matmul %125, %127, %cst_31 {dimension_numbers = #tpu.dot_dimension_numbers<[1], [0], [0], [1], [0, 0, 1, 1], [], []>} : vector<8x32xf32>, vector<32x128xf32>, vector<8x128xf32> -> vector<8x128xf32>
    %129 = arith.addf %126, %128 : vector<8x128xf32>
    %130 = vector.extract_strided_slice %129 {offsets = [0, 0], sizes = [8, 32], strides = [1, 1]} : vector<8x128xf32> to vector<8x32xf32>
    %131 = arith.negf %130 : vector<8x32xf32>
    %132 = math.exp %131 : vector<8x32xf32>
    %cst_32 = arith.constant 1.000000e+00 : f32
    %133 = vector.broadcast %cst_32 : f32 to vector<8x32xf32>
    %134 = arith.addf %133, %132 : vector<8x32xf32>
    %135 = arith.divf %133, %134 : vector<8x32xf32>
    %136 = vector.extract_strided_slice %129 {offsets = [0, 32], sizes = [8, 32], strides = [1, 1]} : vector<8x128xf32> to vector<8x32xf32>
    %137 = arith.negf %136 : vector<8x32xf32>
    %138 = math.exp %137 : vector<8x32xf32>
    %cst_33 = arith.constant 1.000000e+00 : f32
    %139 = vector.broadcast %cst_33 : f32 to vector<8x32xf32>
    %140 = arith.addf %139, %138 : vector<8x32xf32>
    %141 = arith.divf %139, %140 : vector<8x32xf32>
    %142 = vector.extract_strided_slice %129 {offsets = [0, 64], sizes = [8, 32], strides = [1, 1]} : vector<8x128xf32> to vector<8x32xf32>
    %143 = math.tanh %142 : vector<8x32xf32>
    %144 = vector.extract_strided_slice %129 {offsets = [0, 96], sizes = [8, 32], strides = [1, 1]} : vector<8x128xf32> to vector<8x32xf32>
    %145 = arith.negf %144 : vector<8x32xf32>
    %146 = math.exp %145 : vector<8x32xf32>
    %cst_34 = arith.constant 1.000000e+00 : f32
    %147 = vector.broadcast %cst_34 : f32 to vector<8x32xf32>
    %148 = arith.addf %147, %146 : vector<8x32xf32>
    %149 = arith.divf %147, %148 : vector<8x32xf32>
    %150 = arith.mulf %141, %123 : vector<8x32xf32>
    %151 = arith.mulf %135, %143 : vector<8x32xf32>
    %152 = arith.addf %150, %151 : vector<8x32xf32>
    %153 = math.tanh %152 : vector<8x32xf32>
    %154 = arith.mulf %149, %153 : vector<8x32xf32>
    %155 = vector.extract_strided_slice %7 {offsets = [40, 0], sizes = [8, 128], strides = [1, 1]} : vector<64x128xf32> to vector<8x128xf32>
    %c0_35 = arith.constant 0 : index
    %c0_36 = arith.constant 0 : index
    %156 = vector.load %arg2[%c0_35, %c0_36] : memref<32x128xf32, #tpu.memory_space<vmem>>, vector<32x128xf32>
    %cst_37 = arith.constant dense<0.000000e+00> : vector<8x128xf32>
    %157 = tpu.matmul %154, %156, %cst_37 {dimension_numbers = #tpu.dot_dimension_numbers<[1], [0], [0], [1], [0, 0, 1, 1], [], []>} : vector<8x32xf32>, vector<32x128xf32>, vector<8x128xf32> -> vector<8x128xf32>
    %158 = arith.addf %155, %157 : vector<8x128xf32>
    %159 = vector.extract_strided_slice %158 {offsets = [0, 0], sizes = [8, 32], strides = [1, 1]} : vector<8x128xf32> to vector<8x32xf32>
    %160 = arith.negf %159 : vector<8x32xf32>
    %161 = math.exp %160 : vector<8x32xf32>
    %cst_38 = arith.constant 1.000000e+00 : f32
    %162 = vector.broadcast %cst_38 : f32 to vector<8x32xf32>
    %163 = arith.addf %162, %161 : vector<8x32xf32>
    %164 = arith.divf %162, %163 : vector<8x32xf32>
    %165 = vector.extract_strided_slice %158 {offsets = [0, 32], sizes = [8, 32], strides = [1, 1]} : vector<8x128xf32> to vector<8x32xf32>
    %166 = arith.negf %165 : vector<8x32xf32>
    %167 = math.exp %166 : vector<8x32xf32>
    %cst_39 = arith.constant 1.000000e+00 : f32
    %168 = vector.broadcast %cst_39 : f32 to vector<8x32xf32>
    %169 = arith.addf %168, %167 : vector<8x32xf32>
    %170 = arith.divf %168, %169 : vector<8x32xf32>
    %171 = vector.extract_strided_slice %158 {offsets = [0, 64], sizes = [8, 32], strides = [1, 1]} : vector<8x128xf32> to vector<8x32xf32>
    %172 = math.tanh %171 : vector<8x32xf32>
    %173 = vector.extract_strided_slice %158 {offsets = [0, 96], sizes = [8, 32], strides = [1, 1]} : vector<8x128xf32> to vector<8x32xf32>
    %174 = arith.negf %173 : vector<8x32xf32>
    %175 = math.exp %174 : vector<8x32xf32>
    %cst_40 = arith.constant 1.000000e+00 : f32
    %176 = vector.broadcast %cst_40 : f32 to vector<8x32xf32>
    %177 = arith.addf %176, %175 : vector<8x32xf32>
    %178 = arith.divf %176, %177 : vector<8x32xf32>
    %179 = arith.mulf %170, %152 : vector<8x32xf32>
    %180 = arith.mulf %164, %172 : vector<8x32xf32>
    %181 = arith.addf %179, %180 : vector<8x32xf32>
    %182 = math.tanh %181 : vector<8x32xf32>
    %183 = arith.mulf %178, %182 : vector<8x32xf32>
    %184 = vector.extract_strided_slice %7 {offsets = [48, 0], sizes = [8, 128], strides = [1, 1]} : vector<64x128xf32> to vector<8x128xf32>
    %c0_41 = arith.constant 0 : index
    %c0_42 = arith.constant 0 : index
    %185 = vector.load %arg2[%c0_41, %c0_42] : memref<32x128xf32, #tpu.memory_space<vmem>>, vector<32x128xf32>
    %cst_43 = arith.constant dense<0.000000e+00> : vector<8x128xf32>
    %186 = tpu.matmul %183, %185, %cst_43 {dimension_numbers = #tpu.dot_dimension_numbers<[1], [0], [0], [1], [0, 0, 1, 1], [], []>} : vector<8x32xf32>, vector<32x128xf32>, vector<8x128xf32> -> vector<8x128xf32>
    %187 = arith.addf %184, %186 : vector<8x128xf32>
    %188 = vector.extract_strided_slice %187 {offsets = [0, 0], sizes = [8, 32], strides = [1, 1]} : vector<8x128xf32> to vector<8x32xf32>
    %189 = arith.negf %188 : vector<8x32xf32>
    %190 = math.exp %189 : vector<8x32xf32>
    %cst_44 = arith.constant 1.000000e+00 : f32
    %191 = vector.broadcast %cst_44 : f32 to vector<8x32xf32>
    %192 = arith.addf %191, %190 : vector<8x32xf32>
    %193 = arith.divf %191, %192 : vector<8x32xf32>
    %194 = vector.extract_strided_slice %187 {offsets = [0, 32], sizes = [8, 32], strides = [1, 1]} : vector<8x128xf32> to vector<8x32xf32>
    %195 = arith.negf %194 : vector<8x32xf32>
    %196 = math.exp %195 : vector<8x32xf32>
    %cst_45 = arith.constant 1.000000e+00 : f32
    %197 = vector.broadcast %cst_45 : f32 to vector<8x32xf32>
    %198 = arith.addf %197, %196 : vector<8x32xf32>
    %199 = arith.divf %197, %198 : vector<8x32xf32>
    %200 = vector.extract_strided_slice %187 {offsets = [0, 64], sizes = [8, 32], strides = [1, 1]} : vector<8x128xf32> to vector<8x32xf32>
    %201 = math.tanh %200 : vector<8x32xf32>
    %202 = vector.extract_strided_slice %187 {offsets = [0, 96], sizes = [8, 32], strides = [1, 1]} : vector<8x128xf32> to vector<8x32xf32>
    %203 = arith.negf %202 : vector<8x32xf32>
    %204 = math.exp %203 : vector<8x32xf32>
    %cst_46 = arith.constant 1.000000e+00 : f32
    %205 = vector.broadcast %cst_46 : f32 to vector<8x32xf32>
    %206 = arith.addf %205, %204 : vector<8x32xf32>
    %207 = arith.divf %205, %206 : vector<8x32xf32>
    %208 = arith.mulf %199, %181 : vector<8x32xf32>
    %209 = arith.mulf %193, %201 : vector<8x32xf32>
    %210 = arith.addf %208, %209 : vector<8x32xf32>
    %211 = math.tanh %210 : vector<8x32xf32>
    %212 = arith.mulf %207, %211 : vector<8x32xf32>
    %213 = vector.extract_strided_slice %7 {offsets = [56, 0], sizes = [8, 128], strides = [1, 1]} : vector<64x128xf32> to vector<8x128xf32>
    %c0_47 = arith.constant 0 : index
    %c0_48 = arith.constant 0 : index
    %214 = vector.load %arg2[%c0_47, %c0_48] : memref<32x128xf32, #tpu.memory_space<vmem>>, vector<32x128xf32>
    %cst_49 = arith.constant dense<0.000000e+00> : vector<8x128xf32>
    %215 = tpu.matmul %212, %214, %cst_49 {dimension_numbers = #tpu.dot_dimension_numbers<[1], [0], [0], [1], [0, 0, 1, 1], [], []>} : vector<8x32xf32>, vector<32x128xf32>, vector<8x128xf32> -> vector<8x128xf32>
    %216 = arith.addf %213, %215 : vector<8x128xf32>
    %217 = vector.extract_strided_slice %216 {offsets = [0, 0], sizes = [8, 32], strides = [1, 1]} : vector<8x128xf32> to vector<8x32xf32>
    %218 = arith.negf %217 : vector<8x32xf32>
    %219 = math.exp %218 : vector<8x32xf32>
    %cst_50 = arith.constant 1.000000e+00 : f32
    %220 = vector.broadcast %cst_50 : f32 to vector<8x32xf32>
    %221 = arith.addf %220, %219 : vector<8x32xf32>
    %222 = arith.divf %220, %221 : vector<8x32xf32>
    %223 = vector.extract_strided_slice %216 {offsets = [0, 32], sizes = [8, 32], strides = [1, 1]} : vector<8x128xf32> to vector<8x32xf32>
    %224 = arith.negf %223 : vector<8x32xf32>
    %225 = math.exp %224 : vector<8x32xf32>
    %cst_51 = arith.constant 1.000000e+00 : f32
    %226 = vector.broadcast %cst_51 : f32 to vector<8x32xf32>
    %227 = arith.addf %226, %225 : vector<8x32xf32>
    %228 = arith.divf %226, %227 : vector<8x32xf32>
    %229 = vector.extract_strided_slice %216 {offsets = [0, 64], sizes = [8, 32], strides = [1, 1]} : vector<8x128xf32> to vector<8x32xf32>
    %230 = math.tanh %229 : vector<8x32xf32>
    %231 = vector.extract_strided_slice %216 {offsets = [0, 96], sizes = [8, 32], strides = [1, 1]} : vector<8x128xf32> to vector<8x32xf32>
    %232 = arith.negf %231 : vector<8x32xf32>
    %233 = math.exp %232 : vector<8x32xf32>
    %cst_52 = arith.constant 1.000000e+00 : f32
    %234 = vector.broadcast %cst_52 : f32 to vector<8x32xf32>
    %235 = arith.addf %234, %233 : vector<8x32xf32>
    %236 = arith.divf %234, %235 : vector<8x32xf32>
    %237 = arith.mulf %228, %210 : vector<8x32xf32>
    %238 = arith.mulf %222, %230 : vector<8x32xf32>
    %239 = arith.addf %237, %238 : vector<8x32xf32>
    %240 = math.tanh %239 : vector<8x32xf32>
    %241 = arith.mulf %236, %240 : vector<8x32xf32>
    %c0_53 = arith.constant 0 : index
    %c0_54 = arith.constant 0 : index
    %242 = vector.load %arg3[%c0_53, %c0_54] : memref<32x128xf32, #tpu.memory_space<vmem>>, vector<32x128xf32>
    %cst_55 = arith.constant dense<0.000000e+00> : vector<8x128xf32>
    %243 = tpu.matmul %241, %242, %cst_55 {dimension_numbers = #tpu.dot_dimension_numbers<[1], [0], [0], [1], [0, 0, 1, 1], [], []>} : vector<8x32xf32>, vector<32x128xf32>, vector<8x128xf32> -> vector<8x128xf32>
    %c0_56 = arith.constant 0 : index
    %c0_57 = arith.constant 0 : index
    %244 = vector.load %arg4[%c0_56, %c0_57] : memref<1x128xf32, #tpu.memory_space<vmem>>, vector<1x128xf32>
    %245 = vector.broadcast %244 : vector<1x128xf32> to vector<8x128xf32>
    %246 = arith.addf %243, %245 : vector<8x128xf32>
    %c0_58 = arith.constant 0 : index
    %c0_59 = arith.constant 0 : index
    %247 = vector.load %arg5[%c0_58, %c0_59] : memref<8x128xf32, #tpu.memory_space<vmem>>, vector<8x128xf32>
    tpu.vector_store %arg5[%c0_58, %c0_59], %246 {strides = array<i32>} : memref<8x128xf32, #tpu.memory_space<vmem>>, vector<8x128xf32>,
    return
  }
}

</mosaic_0001>

<llo_original>
// kernel: my_model_forward.1
$region0: #{my_model_forward.1}
  #allocation0 [shape = 'u32[]', space=smem, size = 0x4, offset = 0x4, fixed_abs, tag = 'smem constant byte address 0x4 - core index']
  #allocation1 [shape = 'u32[144,128]{1,0:T(1,128)}', space=vmem, size = 0x12000, scoped, tag = 'internal scratch']
  %s0 = inlined_call_operand.vmem [shape: s32[64,1], index: 0, kind: input, shape index: {}]
  %s1 = inlined_call_operand.vmem [shape: f32[32,128], index: 1, kind: input, shape index: {}]
  %s2 = inlined_call_operand.vmem [shape: f32[32,128], index: 2, kind: input, shape index: {}]
  %s3 = inlined_call_operand.vmem [shape: f32[32,128], index: 3, kind: input, shape index: {}]
  %s4 = inlined_call_operand.vmem [shape: f32[1,128], index: 4, kind: input, shape index: {}]
  %s5 = inlined_call_operand.vmem [shape: f32[8,128], index: 5, kind: output, shape index: {}]
  %s6 = sld [smem:[#allocation0]]
  $region30: #{my_model_forward.1} parent=0
    _
  %s8 = ssub.s32 1, %s6
  %s9 = scalar_select 0, %s8, %s6
  // Predicated region
  $region2: #{my_model_forward.1} parent=0 // pred_check
    _
  $region3: #{my_model_forward.1} parent=0 // pred_check_branch
    %11 = sbr.rel (0) target = $region5
  $region4: #{my_model_forward.1} parent=0 // pred_region
    _
  $region5: #{my_model_forward.1} parent=0 // pred_fallthru
    _
  // Predicated region
  $region6: #{my_model_forward.1} parent=0 // pred_check
    _
  $region7: #{my_model_forward.1} parent=0 // pred_check_branch
    %13 = sbr.rel (0) target = $region9
  $region8: #{my_model_forward.1} parent=0 // pred_region
    _
  $region9: #{my_model_forward.1} parent=0 // pred_fallthru
    _
  // Predicated region
  $region10: #{my_model_forward.1} parent=0 // pred_check
    _
  $region11: #{my_model_forward.1} parent=0 // pred_check_branch
    %15 = sbr.rel (0) target = $region13
  $region12: #{my_model_forward.1} parent=0 // pred_region
    _
  $region13: #{my_model_forward.1} parent=0 // pred_fallthru
    _
  // Predicated region
  $region14: #{my_model_forward.1} parent=0 // pred_check
    _
  $region15: #{my_model_forward.1} parent=0 // pred_check_branch
    %17 = sbr.rel (0) target = $region17
  $region16: #{my_model_forward.1} parent=0 // pred_region
    _
  $region17: #{my_model_forward.1} parent=0 // pred_fallthru
    _
  // Predicated region
  $region18: #{my_model_forward.1} parent=0 // pred_check
    _
  $region19: #{my_model_forward.1} parent=0 // pred_check_branch
    %19 = sbr.rel (0) target = $region21
  $region20: #{my_model_forward.1} parent=0 // pred_region
    _
  $region21: #{my_model_forward.1} parent=0 // pred_fallthru
    _
  %v20 = vlaneseq
  %v21 = vand.u32 %v20, 127
  %v22 = vld [vmem:[%s0] sm:$0xff]
  %v23 = vld [vmem:[%s0 + $0x8] sm:$0xff]
  %v24 = vld [vmem:[%s0 + $0x10] sm:$0xff]
  %v25 = vld [vmem:[%s0 + $0x18] sm:$0xff]
  %v26 = vld [vmem:[%s0 + $0x20] sm:$0xff]
  %v27 = vld [vmem:[%s0 + $0x28] sm:$0xff]
  %v28 = vld [vmem:[%s0 + $0x30] sm:$0xff]
  %v29 = vld [vmem:[%s0 + $0x38] sm:$0xff]
  %30 = vset.pattern.permute.xlu0 0
  %31 = vperm.xlu0 %30, %v22
  %v32 = vpop.permute.xlu0 %31
  %33 = vset.pattern.permute.xlu0 0
  %34 = vperm.xlu0 %33, %v23
  %v35 = vpop.permute.xlu0 %34
  %36 = vset.pattern.permute.xlu0 0
  %37 = vperm.xlu0 %36, %v24
  %v38 = vpop.permute.xlu0 %37
  %39 = vset.pattern.permute.xlu0 0
  %40 = vperm.xlu0 %39, %v25
  %v41 = vpop.permute.xlu0 %40
  %42 = vset.pattern.permute.xlu0 0
  %43 = vperm.xlu0 %42, %v26
  %v44 = vpop.permute.xlu0 %43
  %45 = vset.pattern.permute.xlu0 0
  %46 = vperm.xlu0 %45, %v27
  %v47 = vpop.permute.xlu0 %46
  %48 = vset.pattern.permute.xlu0 0
  %49 = vperm.xlu0 %48, %v28
  %v50 = vpop.permute.xlu0 %49
  %51 = vset.pattern.permute.xlu0 0
  %52 = vperm.xlu0 %51, %v29
  %v53 = vpop.permute.xlu0 %52
  %vm54 = vcmp.eq.s32.totalorder %v32, %v21
  %vm55 = vcmp.eq.s32.totalorder %v35, %v21
  %vm56 = vcmp.eq.s32.totalorder %v38, %v21
  %vm57 = vcmp.eq.s32.totalorder %v41, %v21
  %vm58 = vcmp.eq.s32.totalorder %v44, %v21
  %vm59 = vcmp.eq.s32.totalorder %v47, %v21
  %vm60 = vcmp.eq.s32.totalorder %v50, %v21
  %vm61 = vcmp.eq.s32.totalorder %v53, %v21
  %v62 = vsel %vm54, 1, 0
  %v63 = vsel %vm55, 1, 0
  %v64 = vsel %vm56, 1, 0
  %v65 = vsel %vm57, 1, 0
  %v66 = vsel %vm58, 1, 0
  %v67 = vsel %vm59, 1, 0
  %v68 = vsel %vm60, 1, 0
  %v69 = vsel %vm61, 1, 0
  %v70 = vcvt.s32.f32 %v62
  %v71 = vcvt.s32.f32 %v63
  %v72 = vcvt.s32.f32 %v64
  %v73 = vcvt.s32.f32 %v65
  %v74 = vcvt.s32.f32 %v66
  %v75 = vcvt.s32.f32 %v67
  %v76 = vcvt.s32.f32 %v68
  %v77 = vcvt.s32.f32 %v69
  %v78 = vld [vmem:[%s1] sm:$0xff]
  %v79 = vld [vmem:[%s1 + $0x8] sm:$0xff]
  %v80 = vld [vmem:[%s1 + $0x10] sm:$0xff]
  %v81 = vld [vmem:[%s1 + $0x18] sm:$0xff]
  %vm82 = vcmask 261120
  %v84 = vsel %vm82, %v70, 0
  %v87 = vsel %vm82, %v71, 0
  %v90 = vsel %vm82, %v72, 0
  %v93 = vsel %vm82, %v73, 0
  %v96 = vsel %vm82, %v74, 0
  %v99 = vsel %vm82, %v75, 0
  %v102 = vsel %vm82, %v76, 0
  %v105 = vsel %vm82, %v77, 0
  %107 = vmatprep.subr.mxu0 0.0
  %108 = vmatpush1.msra.mxu0 %v78
  %109 = vmatprep.subr.mxu0 0.0
  %110 = vmatpush1.msra.mxu0 %v79
  %111 = vmatprep.subr.mxu0 0.0
  %112 = vmatpush1.msra.mxu0 %v80
  %113 = vmatprep.subr.mxu0 0.0
  %114 = vmatpush1.msra.mxu0 %v81
  %115 = vmatprep.subr.mxu0 0.0
  %116 = vmatpush1.msra.mxu0 0.0
  %117 = vmatprep.subr.mxu0 0.0
  %118 = vmatpush1.msra.mxu0 0.0
  %119 = vmatprep.subr.mxu0 0.0
  %120 = vmatpush1.msra.mxu0 0.0
  %121 = vmatprep.subr.mxu0 0.0
  %122 = vmatpush1.msra.mxu0 0.0
  %123 = vmatprep.subr.mxu0 0.0
  %124 = vmatpush1.msra.mxu0 0.0
  %125 = vmatprep.subr.mxu0 0.0
  %126 = vmatpush1.msra.mxu0 0.0
  %127 = vmatprep.subr.mxu0 0.0
  %128 = vmatpush1.msra.mxu0 0.0
  %129 = vmatprep.subr.mxu0 0.0
  %130 = vmatpush1.msra.mxu0 0.0
  %131 = vmatprep.subr.mxu0 0.0
  %132 = vmatpush1.msra.mxu0 0.0
  %133 = vmatprep.subr.mxu0 0.0
  %134 = vmatpush1.msra.mxu0 0.0
  %135 = vmatprep.subr.mxu0 0.0
  %136 = vmatpush1.msra.mxu0 0.0
  %137 = vmatprep.subr.mxu0 0.0
  %138 = vmatpush1.msra.mxu0 0.0
  %139 = vmatprep.subr.mxu0 0.0
  %140 = vmatpush1.msra.mxu0 0.0
  %141 = vmatprep.subr.mxu0 0.0
  %142 = vmatpush1.msra.mxu0 0.0
  %143 = vmatprep.subr.mxu0 0.0
  %144 = vmatpush1.msra.mxu0 0.0
  %145 = vmatprep.subr.mxu0 0.0
  %146 = vmatpush1.msra.mxu0 0.0
  %147 = vmatprep.subr.mxu0 0.0
  %148 = vmatpush1.msra.mxu0 0.0
  %149 = vmatprep.subr.mxu0 0.0
  %150 = vmatpush1.msra.mxu0 0.0
  %151 = vmatprep.subr.mxu0 0.0
  %152 = vmatpush1.msra.mxu0 0.0
  %153 = vmatprep.subr.mxu0 0.0
  %154 = vmatpush1.msra.mxu0 0.0
  %155 = vmatprep.subr.mxu0 0.0
  %156 = vmatpush1.msra.mxu0 0.0
  %157 = vmatprep.subr.mxu0 0.0
  %158 = vmatpush1.msra.mxu0 0.0
  %159 = vmatprep.subr.mxu0 0.0
  %160 = vmatpush1.msra.mxu0 0.0
  %161 = vmatprep.subr.mxu0 0.0
  %162 = vmatpush1.msra.mxu0 0.0
  %163 = vmatprep.subr.mxu0 0.0
  %164 = vmatpush1.msra.mxu0 0.0
  %165 = vmatprep.subr.mxu0 0.0
  %166 = vmatpush1.msra.mxu0 0.0
  %167 = vmatprep.subr.mxu0 0.0
  %168 = vmatpush1.msra.mxu0 0.0
  %169 = vmatprep.subr.mxu0 0.0
  %170 = vmatpush1.msra.mxu0 0.0
  %171 = vmatprep.mubr.f32.mxu0 0.0
  %172 = vmatmul.mubr.f32.gmra.mrb[0].mxu0 %v84
  %v173 = vpop.f32.mrb[0].mxu0
  %v174 = vadd.f32 0.0, %v173
  %v175 = vpop.f32.mrb[0].mxu0
  %176 = vmatprep.mubr.f32.mxu0 0.0
  %177 = vmatmul.mubr.f32.gmra.mrb[0].mxu0 %v87
  %v178 = vpop.f32.mrb[0].mxu0
  %v179 = vadd.f32 0.0, %v178
  %v180 = vpop.f32.mrb[0].mxu0
  %181 = vmatprep.mubr.f32.mxu0 0.0
  %182 = vmatmul.mubr.f32.gmra.mrb[0].mxu0 %v90
  %v183 = vpop.f32.mrb[0].mxu0
  %v184 = vadd.f32 0.0, %v183
  %v185 = vpop.f32.mrb[0].mxu0
  %186 = vmatprep.mubr.f32.mxu0 0.0
  %187 = vmatmul.mubr.f32.gmra.mrb[0].mxu0 %v93
  %v188 = vpop.f32.mrb[0].mxu0
  %v189 = vadd.f32 0.0, %v188
  %v190 = vpop.f32.mrb[0].mxu0
  %191 = vmatprep.mubr.f32.mxu0 0.0
  %192 = vmatmul.mubr.f32.gmra.mrb[0].mxu0 %v96
  %v193 = vpop.f32.mrb[0].mxu0
  %v194 = vadd.f32 0.0, %v193
  %v195 = vpop.f32.mrb[0].mxu0
  %196 = vmatprep.mubr.f32.mxu0 0.0
  %197 = vmatmul.mubr.f32.gmra.mrb[0].mxu0 %v99
  %v198 = vpop.f32.mrb[0].mxu0
  %v199 = vadd.f32 0.0, %v198
  %v200 = vpop.f32.mrb[0].mxu0
  %201 = vmatprep.mubr.f32.mxu0 0.0
  %202 = vmatmul.mubr.f32.gmra.mrb[0].mxu0 %v102
  %v203 = vpop.f32.mrb[0].mxu0
  %v204 = vadd.f32 0.0, %v203
  %v205 = vpop.f32.mrb[0].mxu0
  %206 = vmatprep.mubr.f32.mxu0 0.0
  %207 = vmatmul.mubr.f32.gmra.mrb[0].mxu0 %v105
  %v208 = vpop.f32.mrb[0].mxu0
  %v209 = vadd.f32 0.0, %v208
  %v210 = vpop.f32.mrb[0].mxu0
  %211 = vdwg.mxu0
  %v212 = vld [vmem:[%s2] sm:$0xff]
  %v213 = vld [vmem:[%s2 + $0x8] sm:$0xff]
  %v214 = vld [vmem:[%s2 + $0x10] sm:$0xff]
  %v215 = vld [vmem:[%s2 + $0x18] sm:$0xff]
  %v217 = vsel %vm82, 0.0, 0
  %219 = vmatprep.subr.mxu0 0.0
  %220 = vmatpush1.msra.mxu0 %v212
  %221 = vmatprep.subr.mxu0 0.0
  %222 = vmatpush1.msra.mxu0 %v213
  %223 = vmatprep.subr.mxu0 0.0
  %224 = vmatpush1.msra.mxu0 %v214
  %225 = vmatprep.subr.mxu0 0.0
  %226 = vmatpush1.msra.mxu0 %v215
  %227 = vmatprep.subr.mxu0 0.0
  %228 = vmatpush1.msra.mxu0 0.0
  %229 = vmatprep.subr.mxu0 0.0
  %230 = vmatpush1.msra.mxu0 0.0
  %231 = vmatprep.subr.mxu0 0.0
  %232 = vmatpush1.msra.mxu0 0.0
  %233 = vmatprep.subr.mxu0 0.0
  %234 = vmatpush1.msra.mxu0 0.0
  %235 = vmatprep.subr.mxu0 0.0
  %236 = vmatpush1.msra.mxu0 0.0
  %237 = vmatprep.subr.mxu0 0.0
  %238 = vmatpush1.msra.mxu0 0.0
  %239 = vmatprep.subr.mxu0 0.0
  %240 = vmatpush1.msra.mxu0 0.0
  %241 = vmatprep.subr.mxu0 0.0
  %242 = vmatpush1.msra.mxu0 0.0
  %243 = vmatprep.subr.mxu0 0.0
  %244 = vmatpush1.msra.mxu0 0.0
  %245 = vmatprep.subr.mxu0 0.0
  %246 = vmatpush1.msra.mxu0 0.0
  %247 = vmatprep.subr.mxu0 0.0
  %248 = vmatpush1.msra.mxu0 0.0
  %249 = vmatprep.subr.mxu0 0.0
  %250 = vmatpush1.msra.mxu0 0.0
  %251 = vmatprep.subr.mxu0 0.0
  %252 = vmatpush1.msra.mxu0 0.0
  %253 = vmatprep.subr.mxu0 0.0
  %254 = vmatpush1.msra.mxu0 0.0
  %255 = vmatprep.subr.mxu0 0.0
  %256 = vmatpush1.msra.mxu0 0.0
  %257 = vmatprep.subr.mxu0 0.0
  %258 = vmatpush1.msra.mxu0 0.0
  %259 = vmatprep.subr.mxu0 0.0
  %260 = vmatpush1.msra.mxu0 0.0
  %261 = vmatprep.subr.mxu0 0.0
  %262 = vmatpush1.msra.mxu0 0.0
  %263 = vmatprep.subr.mxu0 0.0
  %264 = vmatpush1.msra.mxu0 0.0
  %265 = vmatprep.subr.mxu0 0.0
  %266 = vmatpush1.msra.mxu0 0.0
  %267 = vmatprep.subr.mxu0 0.0
  %268 = vmatpush1.msra.mxu0 0.0
  %269 = vmatprep.subr.mxu0 0.0
  %270 = vmatpush1.msra.mxu0 0.0
  %271 = vmatprep.subr.mxu0 0.0
  %272 = vmatpush1.msra.mxu0 0.0
  %273 = vmatprep.subr.mxu0 0.0
  %274 = vmatpush1.msra.mxu0 0.0
  %275 = vmatprep.subr.mxu0 0.0
  %276 = vmatpush1.msra.mxu0 0.0
  %277 = vmatprep.subr.mxu0 0.0
  %278 = vmatpush1.msra.mxu0 0.0
  %279 = vmatprep.subr.mxu0 0.0
  %280 = vmatpush1.msra.mxu0 0.0
  %281 = vmatprep.subr.mxu0 0.0
  %282 = vmatpush1.msra.mxu0 0.0
  %283 = vmatprep.mubr.f32.mxu0 0.0
  %284 = vmatmul.mubr.f32.gmra.mrb[0].mxu0 %v217
  %v285 = vpop.f32.mrb[0].mxu0
  %v286 = vadd.f32 0.0, %v285
  %v287 = vpop.f32.mrb[0].mxu0
  %288 = vdwg.mxu0
  %v289 = vadd.f32 %v174, %v286
  %v290 = vxor.u32 %v289, 2147483648
  %v291 = vmul.f32 %v290, 1.442695
  %v292 = vpow.pop %v291
  %v293 = vadd.f32 %v292, 1.0
  %v294 = vrcp.pop %v293
  %v295 = vmul.f32 1.0, %v294
  %v296 = vtanh.pop %v289
  %v297 = vmul.f32 %v295, 0.0
  %299 = vrot.lane.b32.xlu0 %v296, 64
  %v300 = vpop.permute.xlu0 %299
  %v302 = vmul.f32 %v295, %v300
  %304 = vrot.lane.b32.xlu0 %v302, 32
  %v305 = vpop.permute.xlu0 %304
  %v307 = vadd.f32 %v297, %v305
  %v308 = vtanh.pop %v307
  %310 = vrot.lane.b32.xlu0 %v308, 64
  %v311 = vpop.permute.xlu0 %310
  %v313 = vmul.f32 %v295, %v311
  %315 = vrot.lane.b32.xlu0 %v313, 32
  %v316 = vpop.permute.xlu0 %315
  %v317 = vsel %vm82, %v316, 0
  %319 = vmatprep.subr.mxu0 0.0
  %320 = vmatpush1.msra.mxu0 %v212
  %321 = vmatprep.subr.mxu0 0.0
  %322 = vmatpush1.msra.mxu0 %v213
  %323 = vmatprep.subr.mxu0 0.0
  %324 = vmatpush1.msra.mxu0 %v214
  %325 = vmatprep.subr.mxu0 0.0
  %326 = vmatpush1.msra.mxu0 %v215
  %327 = vmatprep.subr.mxu0 0.0
  %328 = vmatpush1.msra.mxu0 0.0
  %329 = vmatprep.subr.mxu0 0.0
  %330 = vmatpush1.msra.mxu0 0.0
  %331 = vmatprep.subr.mxu0 0.0
  %332 = vmatpush1.msra.mxu0 0.0
  %333 = vmatprep.subr.mxu0 0.0
  %334 = vmatpush1.msra.mxu0 0.0
  %335 = vmatprep.subr.mxu0 0.0
  %336 = vmatpush1.msra.mxu0 0.0
  %337 = vmatprep.subr.mxu0 0.0
  %338 = vmatpush1.msra.mxu0 0.0
  %339 = vmatprep.subr.mxu0 0.0
  %340 = vmatpush1.msra.mxu0 0.0
  %341 = vmatprep.subr.mxu0 0.0
  %342 = vmatpush1.msra.mxu0 0.0
  %343 = vmatprep.subr.mxu0 0.0
  %344 = vmatpush1.msra.mxu0 0.0
  %345 = vmatprep.subr.mxu0 0.0
  %346 = vmatpush1.msra.mxu0 0.0
  %347 = vmatprep.subr.mxu0 0.0
  %348 = vmatpush1.msra.mxu0 0.0
  %349 = vmatprep.subr.mxu0 0.0
  %350 = vmatpush1.msra.mxu0 0.0
  %351 = vmatprep.subr.mxu0 0.0
  %352 = vmatpush1.msra.mxu0 0.0
  %353 = vmatprep.subr.mxu0 0.0
  %354 = vmatpush1.msra.mxu0 0.0
  %355 = vmatprep.subr.mxu0 0.0
  %356 = vmatpush1.msra.mxu0 0.0
  %357 = vmatprep.subr.mxu0 0.0
  %358 = vmatpush1.msra.mxu0 0.0
  %359 = vmatprep.subr.mxu0 0.0
  %360 = vmatpush1.msra.mxu0 0.0
  %361 = vmatprep.subr.mxu0 0.0
  %362 = vmatpush1.msra.mxu0 0.0
  %363 = vmatprep.subr.mxu0 0.0
  %364 = vmatpush1.msra.mxu0 0.0
  %365 = vmatprep.subr.mxu0 0.0
  %366 = vmatpush1.msra.mxu0 0.0
  %367 = vmatprep.subr.mxu0 0.0
  %368 = vmatpush1.msra.mxu0 0.0
  %369 = vmatprep.subr.mxu0 0.0
  %370 = vmatpush1.msra.mxu0 0.0
  %371 = vmatprep.subr.mxu0 0.0
  %372 = vmatpush1.msra.mxu0 0.0
  %373 = vmatprep.subr.mxu0 0.0
  %374 = vmatpush1.msra.mxu0 0.0
  %375 = vmatprep.subr.mxu0 0.0
  %376 = vmatpush1.msra.mxu0 0.0
  %377 = vmatprep.subr.mxu0 0.0
  %378 = vmatpush1.msra.mxu0 0.0
  %379 = vmatprep.subr.mxu0 0.0
  %380 = vmatpush1.msra.mxu0 0.0
  %381 = vmatprep.subr.mxu0 0.0
  %382 = vmatpush1.msra.mxu0 0.0
  %383 = vmatprep.mubr.f32.mxu0 0.0
  %384 = vmatmul.mubr.f32.gmra.mrb[0].mxu0 %v317
  %v385 = vpop.f32.mrb[0].mxu0
  %v386 = vadd.f32 0.0, %v385
  %v387 = vpop.f32.mrb[0].mxu0
  %388 = vdwg.mxu0
  %v389 = vadd.f32 %v179, %v386
  %v390 = vxor.u32 %v389, 2147483648
  %v391 = vmul.f32 %v390, 1.442695
  %v392 = vpow.pop %v391
  %v393 = vadd.f32 %v392, 1.0
  %v394 = vrcp.pop %v393
  %v395 = vmul.f32 1.0, %v394
  %v396 = vtanh.pop %v389
  %v397 = vmul.f32 %v395, %v307
  %399 = vrot.lane.b32.xlu0 %v396, 64
  %v400 = vpop.permute.xlu0 %399
  %v402 = vmul.f32 %v395, %v400
  %404 = vrot.lane.b32.xlu0 %v402, 32
  %v405 = vpop.permute.xlu0 %404
  %v407 = vadd.f32 %v397, %v405
  %v408 = vtanh.pop %v407
  %410 = vrot.lane.b32.xlu0 %v408, 64
  %v411 = vpop.permute.xlu0 %410
  %v413 = vmul.f32 %v395, %v411
  %415 = vrot.lane.b32.xlu0 %v413, 32
  %v416 = vpop.permute.xlu0 %415
  %v417 = vsel %vm82, %v416, 0
  %419 = vmatprep.subr.mxu0 0.0
  %420 = vmatpush1.msra.mxu0 %v212
  %421 = vmatprep.subr.mxu0 0.0
  %422 = vmatpush1.msra.mxu0 %v213
  %423 = vmatprep.subr.mxu0 0.0
  %424 = vmatpush1.msra.mxu0 %v214
  %425 = vmatprep.subr.mxu0 0.0
  %426 = vmatpush1.msra.mxu0 %v215
  %427 = vmatprep.subr.mxu0 0.0
  %428 = vmatpush1.msra.mxu0 0.0
  %429 = vmatprep.subr.mxu0 0.0
  %430 = vmatpush1.msra.mxu0 0.0
  %431 = vmatprep.subr.mxu0 0.0
  %432 = vmatpush1.msra.mxu0 0.0
  %433 = vmatprep.subr.mxu0 0.0
  %434 = vmatpush1.msra.mxu0 0.0
  %435 = vmatprep.subr.mxu0 0.0
  %436 = vmatpush1.msra.mxu0 0.0
  %437 = vmatprep.subr.mxu0 0.0
  %438 = vmatpush1.msra.mxu0 0.0
  %439 = vmatprep.subr.mxu0 0.0
  %440 = vmatpush1.msra.mxu0 0.0
  %441 = vmatprep.subr.mxu0 0.0
  %442 = vmatpush1.msra.mxu0 0.0
  %443 = vmatprep.subr.mxu0 0.0
  %444 = vmatpush1.msra.mxu0 0.0
  %445 = vmatprep.subr.mxu0 0.0
  %446 = vmatpush1.msra.mxu0 0.0
  %447 = vmatprep.subr.mxu0 0.0
  %448 = vmatpush1.msra.mxu0 0.0
  %449 = vmatprep.subr.mxu0 0.0
  %450 = vmatpush1.msra.mxu0 0.0
  %451 = vmatprep.subr.mxu0 0.0
  %452 = vmatpush1.msra.mxu0 0.0
  %453 = vmatprep.subr.mxu0 0.0
  %454 = vmatpush1.msra.mxu0 0.0
  %455 = vmatprep.subr.mxu0 0.0
  %456 = vmatpush1.msra.mxu0 0.0
  %457 = vmatprep.subr.mxu0 0.0
  %458 = vmatpush1.msra.mxu0 0.0
  %459 = vmatprep.subr.mxu0 0.0
  %460 = vmatpush1.msra.mxu0 0.0
  %461 = vmatprep.subr.mxu0 0.0
  %462 = vmatpush1.msra.mxu0 0.0
  %463 = vmatprep.subr.mxu0 0.0
  %464 = vmatpush1.msra.mxu0 0.0
  %465 = vmatprep.subr.mxu0 0.0
  %466 = vmatpush1.msra.mxu0 0.0
  %467 = vmatprep.subr.mxu0 0.0
  %468 = vmatpush1.msra.mxu0 0.0
  %469 = vmatprep.subr.mxu0 0.0
  %470 = vmatpush1.msra.mxu0 0.0
  %471 = vmatprep.subr.mxu0 0.0
  %472 = vmatpush1.msra.mxu0 0.0
  %473 = vmatprep.subr.mxu0 0.0
  %474 = vmatpush1.msra.mxu0 0.0
  %475 = vmatprep.subr.mxu0 0.0
  %476 = vmatpush1.msra.mxu0 0.0
  %477 = vmatprep.subr.mxu0 0.0
  %478 = vmatpush1.msra.mxu0 0.0
  %479 = vmatprep.subr.mxu0 0.0
  %480 = vmatpush1.msra.mxu0 0.0
  %481 = vmatprep.subr.mxu0 0.0
  %482 = vmatpush1.msra.mxu0 0.0
  %483 = vmatprep.mubr.f32.mxu0 0.0
  %484 = vmatmul.mubr.f32.gmra.mrb[0].mxu0 %v417
  %v485 = vpop.f32.mrb[0].mxu0
  %v486 = vadd.f32 0.0, %v485
  %v487 = vpop.f32.mrb[0].mxu0
  %488 = vdwg.mxu0
  %v489 = vadd.f32 %v184, %v486
  %v490 = vxor.u32 %v489, 2147483648
  %v491 = vmul.f32 %v490, 1.442695
  %v492 = vpow.pop %v491
  %v493 = vadd.f32 %v492, 1.0
  %v494 = vrcp.pop %v493
  %v495 = vmul.f32 1.0, %v494
  %v496 = vtanh.pop %v489
  %v497 = vmul.f32 %v495, %v407
  %499 = vrot.lane.b32.xlu0 %v496, 64
  %v500 = vpop.permute.xlu0 %499
  %v502 = vmul.f32 %v495, %v500
  %504 = vrot.lane.b32.xlu0 %v502, 32
  %v505 = vpop.permute.xlu0 %504
  %v507 = vadd.f32 %v497, %v505
  %v508 = vtanh.pop %v507
  %510 = vrot.lane.b32.xlu0 %v508, 64
  %v511 = vpop.permute.xlu0 %510
  %v513 = vmul.f32 %v495, %v511
  %515 = vrot.lane.b32.xlu0 %v513, 32
  %v516 = vpop.permute.xlu0 %515
  %v517 = vsel %vm82, %v516, 0
  %519 = vmatprep.subr.mxu0 0.0
  %520 = vmatpush1.msra.mxu0 %v212
  %521 = vmatprep.subr.mxu0 0.0
  %522 = vmatpush1.msra.mxu0 %v213
  %523 = vmatprep.subr.mxu0 0.0
  %524 = vmatpush1.msra.mxu0 %v214
  %525 = vmatprep.subr.mxu0 0.0
  %526 = vmatpush1.msra.mxu0 %v215
  %527 = vmatprep.subr.mxu0 0.0
  %528 = vmatpush1.msra.mxu0 0.0
  %529 = vmatprep.subr.mxu0 0.0
  %530 = vmatpush1.msra.mxu0 0.0
  %531 = vmatprep.subr.mxu0 0.0
  %532 = vmatpush1.msra.mxu0 0.0
  %533 = vmatprep.subr.mxu0 0.0
  %534 = vmatpush1.msra.mxu0 0.0
  %535 = vmatprep.subr.mxu0 0.0
  %536 = vmatpush1.msra.mxu0 0.0
  %537 = vmatprep.subr.mxu0 0.0
  %538 = vmatpush1.msra.mxu0 0.0
  %539 = vmatprep.subr.mxu0 0.0
  %540 = vmatpush1.msra.mxu0 0.0
  %541 = vmatprep.subr.mxu0 0.0
  %542 = vmatpush1.msra.mxu0 0.0
  %543 = vmatprep.subr.mxu0 0.0
  %544 = vmatpush1.msra.mxu0 0.0
  %545 = vmatprep.subr.mxu0 0.0
  %546 = vmatpush1.msra.mxu0 0.0
  %547 = vmatprep.subr.mxu0 0.0
  %548 = vmatpush1.msra.mxu0 0.0
  %549 = vmatprep.subr.mxu0 0.0
  %550 = vmatpush1.msra.mxu0 0.0
  %551 = vmatprep.subr.mxu0 0.0
  %552 = vmatpush1.msra.mxu0 0.0
  %553 = vmatprep.subr.mxu0 0.0
  %554 = vmatpush1.msra.mxu0 0.0
  %555 = vmatprep.subr.mxu0 0.0
  %556 = vmatpush1.msra.mxu0 0.0
  %557 = vmatprep.subr.mxu0 0.0
  %558 = vmatpush1.msra.mxu0 0.0
  %559 = vmatprep.subr.mxu0 0.0
  %560 = vmatpush1.msra.mxu0 0.0
  %561 = vmatprep.subr.mxu0 0.0
  %562 = vmatpush1.msra.mxu0 0.0
  %563 = vmatprep.subr.mxu0 0.0
  %564 = vmatpush1.msra.mxu0 0.0
  %565 = vmatprep.subr.mxu0 0.0
  %566 = vmatpush1.msra.mxu0 0.0
  %567 = vmatprep.subr.mxu0 0.0
  %568 = vmatpush1.msra.mxu0 0.0
  %569 = vmatprep.subr.mxu0 0.0
  %570 = vmatpush1.msra.mxu0 0.0
  %571 = vmatprep.subr.mxu0 0.0
  %572 = vmatpush1.msra.mxu0 0.0
  %573 = vmatprep.subr.mxu0 0.0
  %574 = vmatpush1.msra.mxu0 0.0
  %575 = vmatprep.subr.mxu0 0.0
  %576 = vmatpush1.msra.mxu0 0.0
  %577 = vmatprep.subr.mxu0 0.0
  %578 = vmatpush1.msra.mxu0 0.0
  %579 = vmatprep.subr.mxu0 0.0
  %580 = vmatpush1.msra.mxu0 0.0
  %581 = vmatprep.subr.mxu0 0.0
  %582 = vmatpush1.msra.mxu0 0.0
  %583 = vmatprep.mubr.f32.mxu0 0.0
  %584 = vmatmul.mubr.f32.gmra.mrb[0].mxu0 %v517
  %v585 = vpop.f32.mrb[0].mxu0
  %v586 = vadd.f32 0.0, %v585
  %v587 = vpop.f32.mrb[0].mxu0
  %588 = vdwg.mxu0
  %v589 = vadd.f32 %v189, %v586
  %v590 = vxor.u32 %v589, 2147483648
  %v591 = vmul.f32 %v590, 1.442695
  %v592 = vpow.pop %v591
  %v593 = vadd.f32 %v592, 1.0
  %v594 = vrcp.pop %v593
  %v595 = vmul.f32 1.0, %v594
  %v596 = vtanh.pop %v589
  %v597 = vmul.f32 %v595, %v507
  %599 = vrot.lane.b32.xlu0 %v596, 64
  %v600 = vpop.permute.xlu0 %599
  %v602 = vmul.f32 %v595, %v600
  %604 = vrot.lane.b32.xlu0 %v602, 32
  %v605 = vpop.permute.xlu0 %604
  %v607 = vadd.f32 %v597, %v605
  %v608 = vtanh.pop %v607
  %610 = vrot.lane.b32.xlu0 %v608, 64
  %v611 = vpop.permute.xlu0 %610
  %v613 = vmul.f32 %v595, %v611
  %615 = vrot.lane.b32.xlu0 %v613, 32
  %v616 = vpop.permute.xlu0 %615
  %v617 = vsel %vm82, %v616, 0
  %619 = vmatprep.subr.mxu0 0.0
  %620 = vmatpush1.msra.mxu0 %v212
  %621 = vmatprep.subr.mxu0 0.0
  %622 = vmatpush1.msra.mxu0 %v213
  %623 = vmatprep.subr.mxu0 0.0
  %624 = vmatpush1.msra.mxu0 %v214
  %625 = vmatprep.subr.mxu0 0.0
  %626 = vmatpush1.msra.mxu0 %v215
  %627 = vmatprep.subr.mxu0 0.0
  %628 = vmatpush1.msra.mxu0 0.0
  %629 = vmatprep.subr.mxu0 0.0
  %630 = vmatpush1.msra.mxu0 0.0
  %631 = vmatprep.subr.mxu0 0.0
  %632 = vmatpush1.msra.mxu0 0.0
  %633 = vmatprep.subr.mxu0 0.0
  %634 = vmatpush1.msra.mxu0 0.0
  %635 = vmatprep.subr.mxu0 0.0
  %636 = vmatpush1.msra.mxu0 0.0
  %637 = vmatprep.subr.mxu0 0.0
  %638 = vmatpush1.msra.mxu0 0.0
  %639 = vmatprep.subr.mxu0 0.0
  %640 = vmatpush1.msra.mxu0 0.0
  %641 = vmatprep.subr.mxu0 0.0
  %642 = vmatpush1.msra.mxu0 0.0
  %643 = vmatprep.subr.mxu0 0.0
  %644 = vmatpush1.msra.mxu0 0.0
  %645 = vmatprep.subr.mxu0 0.0
  %646 = vmatpush1.msra.mxu0 0.0
  %647 = vmatprep.subr.mxu0 0.0
  %648 = vmatpush1.msra.mxu0 0.0
  %649 = vmatprep.subr.mxu0 0.0
  %650 = vmatpush1.msra.mxu0 0.0
  %651 = vmatprep.subr.mxu0 0.0
  %652 = vmatpush1.msra.mxu0 0.0
  %653 = vmatprep.subr.mxu0 0.0
  %654 = vmatpush1.msra.mxu0 0.0
  %655 = vmatprep.subr.mxu0 0.0
  %656 = vmatpush1.msra.mxu0 0.0
  %657 = vmatprep.subr.mxu0 0.0
  %658 = vmatpush1.msra.mxu0 0.0
  %659 = vmatprep.subr.mxu0 0.0
  %660 = vmatpush1.msra.mxu0 0.0
  %661 = vmatprep.subr.mxu0 0.0
  %662 = vmatpush1.msra.mxu0 0.0
  %663 = vmatprep.subr.mxu0 0.0
  %664 = vmatpush1.msra.mxu0 0.0
  %665 = vmatprep.subr.mxu0 0.0
  %666 = vmatpush1.msra.mxu0 0.0
  %667 = vmatprep.subr.mxu0 0.0
  %668 = vmatpush1.msra.mxu0 0.0
  %669 = vmatprep.subr.mxu0 0.0
  %670 = vmatpush1.msra.mxu0 0.0
  %671 = vmatprep.subr.mxu0 0.0
  %672 = vmatpush1.msra.mxu0 0.0
  %673 = vmatprep.subr.mxu0 0.0
  %674 = vmatpush1.msra.mxu0 0.0
  %675 = vmatprep.subr.mxu0 0.0
  %676 = vmatpush1.msra.mxu0 0.0
  %677 = vmatprep.subr.mxu0 0.0
  %678 = vmatpush1.msra.mxu0 0.0
  %679 = vmatprep.subr.mxu0 0.0
  %680 = vmatpush1.msra.mxu0 0.0
  %681 = vmatprep.subr.mxu0 0.0
  %682 = vmatpush1.msra.mxu0 0.0
  %683 = vmatprep.mubr.f32.mxu0 0.0
  %684 = vmatmul.mubr.f32.gmra.mrb[0].mxu0 %v617
  %v685 = vpop.f32.mrb[0].mxu0
  %v686 = vadd.f32 0.0, %v685
  %v687 = vpop.f32.mrb[0].mxu0
  %688 = vdwg.mxu0
  %v689 = vadd.f32 %v194, %v686
  %v690 = vxor.u32 %v689, 2147483648
  %v691 = vmul.f32 %v690, 1.442695
  %v692 = vpow.pop %v691
  %v693 = vadd.f32 %v692, 1.0
  %v694 = vrcp.pop %v693
  %v695 = vmul.f32 1.0, %v694
  %v696 = vtanh.pop %v689
  %v697 = vmul.f32 %v695, %v607
  %699 = vrot.lane.b32.xlu0 %v696, 64
  %v700 = vpop.permute.xlu0 %699
  %v702 = vmul.f32 %v695, %v700
  %704 = vrot.lane.b32.xlu0 %v702, 32
  %v705 = vpop.permute.xlu0 %704
  %v707 = vadd.f32 %v697, %v705
  %v708 = vtanh.pop %v707
  %710 = vrot.lane.b32.xlu0 %v708, 64
  %v711 = vpop.permute.xlu0 %710
  %v713 = vmul.f32 %v695, %v711
  %715 = vrot.lane.b32.xlu0 %v713, 32
  %v716 = vpop.permute.xlu0 %715
  %v717 = vsel %vm82, %v716, 0
  %719 = vmatprep.subr.mxu0 0.0
  %720 = vmatpush1.msra.mxu0 %v212
  %721 = vmatprep.subr.mxu0 0.0
  %722 = vmatpush1.msra.mxu0 %v213
  %723 = vmatprep.subr.mxu0 0.0
  %724 = vmatpush1.msra.mxu0 %v214
  %725 = vmatprep.subr.mxu0 0.0
  %726 = vmatpush1.msra.mxu0 %v215
  %727 = vmatprep.subr.mxu0 0.0
  %728 = vmatpush1.msra.mxu0 0.0
  %729 = vmatprep.subr.mxu0 0.0
  %730 = vmatpush1.msra.mxu0 0.0
  %731 = vmatprep.subr.mxu0 0.0
  %732 = vmatpush1.msra.mxu0 0.0
  %733 = vmatprep.subr.mxu0 0.0
  %734 = vmatpush1.msra.mxu0 0.0
  %735 = vmatprep.subr.mxu0 0.0
  %736 = vmatpush1.msra.mxu0 0.0
  %737 = vmatprep.subr.mxu0 0.0
  %738 = vmatpush1.msra.mxu0 0.0
  %739 = vmatprep.subr.mxu0 0.0
  %740 = vmatpush1.msra.mxu0 0.0
  %741 = vmatprep.subr.mxu0 0.0
  %742 = vmatpush1.msra.mxu0 0.0
  %743 = vmatprep.subr.mxu0 0.0
  %744 = vmatpush1.msra.mxu0 0.0
  %745 = vmatprep.subr.mxu0 0.0
  %746 = vmatpush1.msra.mxu0 0.0
  %747 = vmatprep.subr.mxu0 0.0
  %748 = vmatpush1.msra.mxu0 0.0
  %749 = vmatprep.subr.mxu0 0.0
  %750 = vmatpush1.msra.mxu0 0.0
  %751 = vmatprep.subr.mxu0 0.0
  %752 = vmatpush1.msra.mxu0 0.0
  %753 = vmatprep.subr.mxu0 0.0
  %754 = vmatpush1.msra.mxu0 0.0
  %755 = vmatprep.subr.mxu0 0.0
  %756 = vmatpush1.msra.mxu0 0.0
  %757 = vmatprep.subr.mxu0 0.0
  %758 = vmatpush1.msra.mxu0 0.0
  %759 = vmatprep.subr.mxu0 0.0
  %760 = vmatpush1.msra.mxu0 0.0
  %761 = vmatprep.subr.mxu0 0.0
  %762 = vmatpush1.msra.mxu0 0.0
  %763 = vmatprep.subr.mxu0 0.0
  %764 = vmatpush1.msra.mxu0 0.0
  %765 = vmatprep.subr.mxu0 0.0
  %766 = vmatpush1.msra.mxu0 0.0
  %767 = vmatprep.subr.mxu0 0.0
  %768 = vmatpush1.msra.mxu0 0.0
  %769 = vmatprep.subr.mxu0 0.0
  %770 = vmatpush1.msra.mxu0 0.0
  %771 = vmatprep.subr.mxu0 0.0
  %772 = vmatpush1.msra.mxu0 0.0
  %773 = vmatprep.subr.mxu0 0.0
  %774 = vmatpush1.msra.mxu0 0.0
  %775 = vmatprep.subr.mxu0 0.0
  %776 = vmatpush1.msra.mxu0 0.0
  %777 = vmatprep.subr.mxu0 0.0
  %778 = vmatpush1.msra.mxu0 0.0
  %779 = vmatprep.subr.mxu0 0.0
  %780 = vmatpush1.msra.mxu0 0.0
  %781 = vmatprep.subr.mxu0 0.0
  %782 = vmatpush1.msra.mxu0 0.0
  %783 = vmatprep.mubr.f32.mxu0 0.0
  %784 = vmatmul.mubr.f32.gmra.mrb[0].mxu0 %v717
  %v785 = vpop.f32.mrb[0].mxu0
  %v786 = vadd.f32 0.0, %v785
  %v787 = vpop.f32.mrb[0].mxu0
  %788 = vdwg.mxu0
  %v789 = vadd.f32 %v199, %v786
  %v790 = vxor.u32 %v789, 2147483648
  %v791 = vmul.f32 %v790, 1.442695
  %v792 = vpow.pop %v791
  %v793 = vadd.f32 %v792, 1.0
  %v794 = vrcp.pop %v793
  %v795 = vmul.f32 1.0, %v794
  %v796 = vtanh.pop %v789
  %v797 = vmul.f32 %v795, %v707
  %799 = vrot.lane.b32.xlu0 %v796, 64
  %v800 = vpop.permute.xlu0 %799
  %v802 = vmul.f32 %v795, %v800
  %804 = vrot.lane.b32.xlu0 %v802, 32
  %v805 = vpop.permute.xlu0 %804
  %v807 = vadd.f32 %v797, %v805
  %v808 = vtanh.pop %v807
  %810 = vrot.lane.b32.xlu0 %v808, 64
  %v811 = vpop.permute.xlu0 %810
  %v813 = vmul.f32 %v795, %v811
  %815 = vrot.lane.b32.xlu0 %v813, 32
  %v816 = vpop.permute.xlu0 %815
  %v817 = vsel %vm82, %v816, 0
  %819 = vmatprep.subr.mxu0 0.0
  %820 = vmatpush1.msra.mxu0 %v212
  %821 = vmatprep.subr.mxu0 0.0
  %822 = vmatpush1.msra.mxu0 %v213
  %823 = vmatprep.subr.mxu0 0.0
  %824 = vmatpush1.msra.mxu0 %v214
  %825 = vmatprep.subr.mxu0 0.0
  %826 = vmatpush1.msra.mxu0 %v215
  %827 = vmatprep.subr.mxu0 0.0
  %828 = vmatpush1.msra.mxu0 0.0
  %829 = vmatprep.subr.mxu0 0.0
  %830 = vmatpush1.msra.mxu0 0.0
  %831 = vmatprep.subr.mxu0 0.0
  %832 = vmatpush1.msra.mxu0 0.0
  %833 = vmatprep.subr.mxu0 0.0
  %834 = vmatpush1.msra.mxu0 0.0
  %835 = vmatprep.subr.mxu0 0.0
  %836 = vmatpush1.msra.mxu0 0.0
  %837 = vmatprep.subr.mxu0 0.0
  %838 = vmatpush1.msra.mxu0 0.0
  %839 = vmatprep.subr.mxu0 0.0
  %840 = vmatpush1.msra.mxu0 0.0
  %841 = vmatprep.subr.mxu0 0.0
  %842 = vmatpush1.msra.mxu0 0.0
  %843 = vmatprep.subr.mxu0 0.0
  %844 = vmatpush1.msra.mxu0 0.0
  %845 = vmatprep.subr.mxu0 0.0
  %846 = vmatpush1.msra.mxu0 0.0
  %847 = vmatprep.subr.mxu0 0.0
  %848 = vmatpush1.msra.mxu0 0.0
  %849 = vmatprep.subr.mxu0 0.0
  %850 = vmatpush1.msra.mxu0 0.0
  %851 = vmatprep.subr.mxu0 0.0
  %852 = vmatpush1.msra.mxu0 0.0
  %853 = vmatprep.subr.mxu0 0.0
  %854 = vmatpush1.msra.mxu0 0.0
  %855 = vmatprep.subr.mxu0 0.0
  %856 = vmatpush1.msra.mxu0 0.0
  %857 = vmatprep.subr.mxu0 0.0
  %858 = vmatpush1.msra.mxu0 0.0
  %859 = vmatprep.subr.mxu0 0.0
  %860 = vmatpush1.msra.mxu0 0.0
  %861 = vmatprep.subr.mxu0 0.0
  %862 = vmatpush1.msra.mxu0 0.0
  %863 = vmatprep.subr.mxu0 0.0
  %864 = vmatpush1.msra.mxu0 0.0
  %865 = vmatprep.subr.mxu0 0.0
  %866 = vmatpush1.msra.mxu0 0.0
  %867 = vmatprep.subr.mxu0 0.0
  %868 = vmatpush1.msra.mxu0 0.0
  %869 = vmatprep.subr.mxu0 0.0
  %870 = vmatpush1.msra.mxu0 0.0
  %871 = vmatprep.subr.mxu0 0.0
  %872 = vmatpush1.msra.mxu0 0.0
  %873 = vmatprep.subr.mxu0 0.0
  %874 = vmatpush1.msra.mxu0 0.0
  %875 = vmatprep.subr.mxu0 0.0
  %876 = vmatpush1.msra.mxu0 0.0
  %877 = vmatprep.subr.mxu0 0.0
  %878 = vmatpush1.msra.mxu0 0.0
  %879 = vmatprep.subr.mxu0 0.0
  %880 = vmatpush1.msra.mxu0 0.0
  %881 = vmatprep.subr.mxu0 0.0
  %882 = vmatpush1.msra.mxu0 0.0
  %883 = vmatprep.mubr.f32.mxu0 0.0
  %884 = vmatmul.mubr.f32.gmra.mrb[0].mxu0 %v817
  %v885 = vpop.f32.mrb[0].mxu0
  %v886 = vadd.f32 0.0, %v885
  %v887 = vpop.f32.mrb[0].mxu0
  %888 = vdwg.mxu0
  %v889 = vadd.f32 %v204, %v886
  %v890 = vxor.u32 %v889, 2147483648
  %v891 = vmul.f32 %v890, 1.442695
  %v892 = vpow.pop %v891
  %v893 = vadd.f32 %v892, 1.0
  %v894 = vrcp.pop %v893
  %v895 = vmul.f32 1.0, %v894
  %v896 = vtanh.pop %v889
  %v897 = vmul.f32 %v895, %v807
  %899 = vrot.lane.b32.xlu0 %v896, 64
  %v900 = vpop.permute.xlu0 %899
  %v902 = vmul.f32 %v895, %v900
  %904 = vrot.lane.b32.xlu0 %v902, 32
  %v905 = vpop.permute.xlu0 %904
  %v907 = vadd.f32 %v897, %v905
  %v908 = vtanh.pop %v907
  %910 = vrot.lane.b32.xlu0 %v908, 64
  %v911 = vpop.permute.xlu0 %910
  %v913 = vmul.f32 %v895, %v911
  %915 = vrot.lane.b32.xlu0 %v913, 32
  %v916 = vpop.permute.xlu0 %915
  %v917 = vsel %vm82, %v916, 0
  %919 = vmatprep.subr.mxu0 0.0
  %920 = vmatpush1.msra.mxu0 %v212
  %921 = vmatprep.subr.mxu0 0.0
  %922 = vmatpush1.msra.mxu0 %v213
  %923 = vmatprep.subr.mxu0 0.0
  %924 = vmatpush1.msra.mxu0 %v214
  %925 = vmatprep.subr.mxu0 0.0
  %926 = vmatpush1.msra.mxu0 %v215
  %927 = vmatprep.subr.mxu0 0.0
  %928 = vmatpush1.msra.mxu0 0.0
  %929 = vmatprep.subr.mxu0 0.0
  %930 = vmatpush1.msra.mxu0 0.0
  %931 = vmatprep.subr.mxu0 0.0
  %932 = vmatpush1.msra.mxu0 0.0
  %933 = vmatprep.subr.mxu0 0.0
  %934 = vmatpush1.msra.mxu0 0.0
  %935 = vmatprep.subr.mxu0 0.0
  %936 = vmatpush1.msra.mxu0 0.0
  %937 = vmatprep.subr.mxu0 0.0
  %938 = vmatpush1.msra.mxu0 0.0
  %939 = vmatprep.subr.mxu0 0.0
  %940 = vmatpush1.msra.mxu0 0.0
  %941 = vmatprep.subr.mxu0 0.0
  %942 = vmatpush1.msra.mxu0 0.0
  %943 = vmatprep.subr.mxu0 0.0
  %944 = vmatpush1.msra.mxu0 0.0
  %945 = vmatprep.subr.mxu0 0.0
  %946 = vmatpush1.msra.mxu0 0.0
  %947 = vmatprep.subr.mxu0 0.0
  %948 = vmatpush1.msra.mxu0 0.0
  %949 = vmatprep.subr.mxu0 0.0
  %950 = vmatpush1.msra.mxu0 0.0
  %951 = vmatprep.subr.mxu0 0.0
  %952 = vmatpush1.msra.mxu0 0.0
  %953 = vmatprep.subr.mxu0 0.0
  %954 = vmatpush1.msra.mxu0 0.0
  %955 = vmatprep.subr.mxu0 0.0
  %956 = vmatpush1.msra.mxu0 0.0
  %957 = vmatprep.subr.mxu0 0.0
  %958 = vmatpush1.msra.mxu0 0.0
  %959 = vmatprep.subr.mxu0 0.0
  %960 = vmatpush1.msra.mxu0 0.0
  %961 = vmatprep.subr.mxu0 0.0
  %962 = vmatpush1.msra.mxu0 0.0
  %963 = vmatprep.subr.mxu0 0.0
  %964 = vmatpush1.msra.mxu0 0.0
  %965 = vmatprep.subr.mxu0 0.0
  %966 = vmatpush1.msra.mxu0 0.0
  %967 = vmatprep.subr.mxu0 0.0
  %968 = vmatpush1.msra.mxu0 0.0
  %969 = vmatprep.subr.mxu0 0.0
  %970 = vmatpush1.msra.mxu0 0.0
  %971 = vmatprep.subr.mxu0 0.0
  %972 = vmatpush1.msra.mxu0 0.0
  %973 = vmatprep.subr.mxu0 0.0
  %974 = vmatpush1.msra.mxu0 0.0
  %975 = vmatprep.subr.mxu0 0.0
  %976 = vmatpush1.msra.mxu0 0.0
  %977 = vmatprep.subr.mxu0 0.0
  %978 = vmatpush1.msra.mxu0 0.0
  %979 = vmatprep.subr.mxu0 0.0
  %980 = vmatpush1.msra.mxu0 0.0
  %981 = vmatprep.subr.mxu0 0.0
  %982 = vmatpush1.msra.mxu0 0.0
  %983 = vmatprep.mubr.f32.mxu0 0.0
  %984 = vmatmul.mubr.f32.gmra.mrb[0].mxu0 %v917
  %v985 = vpop.f32.mrb[0].mxu0
  %v986 = vadd.f32 0.0, %v985
  %v987 = vpop.f32.mrb[0].mxu0
  %988 = vdwg.mxu0
  %v989 = vadd.f32 %v209, %v986
  %v990 = vxor.u32 %v989, 2147483648
  %v991 = vmul.f32 %v990, 1.442695
  %v992 = vpow.pop %v991
  %v993 = vadd.f32 %v992, 1.0
  %v994 = vrcp.pop %v993
  %v995 = vmul.f32 1.0, %v994
  %v996 = vtanh.pop %v989
  %v997 = vmul.f32 %v995, %v907
  %999 = vrot.lane.b32.xlu0 %v996, 64
  %v1000 = vpop.permute.xlu0 %999
  %v1002 = vmul.f32 %v995, %v1000
  %1004 = vrot.lane.b32.xlu0 %v1002, 32
  %v1005 = vpop.permute.xlu0 %1004
  %v1007 = vadd.f32 %v997, %v1005
  %v1008 = vtanh.pop %v1007
  %1010 = vrot.lane.b32.xlu0 %v1008, 64
  %v1011 = vpop.permute.xlu0 %1010
  %v1013 = vmul.f32 %v995, %v1011
  %v1014 = vld [vmem:[%s3] sm:$0xff]
  %v1015 = vld [vmem:[%s3 + $0x8] sm:$0xff]
  %v1016 = vld [vmem:[%s3 + $0x10] sm:$0xff]
  %v1017 = vld [vmem:[%s3 + $0x18] sm:$0xff]
  %v1018 = vld [vmem:[%s4] sm:$0x1]
  %v1020 = vlaneseq
  %v1021 = vshrl.u32 %v1020, 7
  %v1022 = vsub.s32 0, %v1021
  %v1023 = vrot.slane %v1018, %v1022
  %1026 = vrot.lane.b32.xlu0 %v1013, 32
  %v1027 = vpop.permute.xlu0 %1026
  %v1028 = vsel %vm82, %v1027, 0
  %1030 = vmatprep.subr.mxu0 0.0
  %1031 = vmatpush1.msra.mxu0 %v1014
  %1032 = vmatprep.subr.mxu0 0.0
  %1033 = vmatpush1.msra.mxu0 %v1015
  %1034 = vmatprep.subr.mxu0 0.0
  %1035 = vmatpush1.msra.mxu0 %v1016
  %1036 = vmatprep.subr.mxu0 0.0
  %1037 = vmatpush1.msra.mxu0 %v1017
  %1038 = vmatprep.subr.mxu0 0.0
  %1039 = vmatpush1.msra.mxu0 0.0
  %1040 = vmatprep.subr.mxu0 0.0
  %1041 = vmatpush1.msra.mxu0 0.0
  %1042 = vmatprep.subr.mxu0 0.0
  %1043 = vmatpush1.msra.mxu0 0.0
  %1044 = vmatprep.subr.mxu0 0.0
  %1045 = vmatpush1.msra.mxu0 0.0
  %1046 = vmatprep.subr.mxu0 0.0
  %1047 = vmatpush1.msra.mxu0 0.0
  %1048 = vmatprep.subr.mxu0 0.0
  %1049 = vmatpush1.msra.mxu0 0.0
  %1050 = vmatprep.subr.mxu0 0.0
  %1051 = vmatpush1.msra.mxu0 0.0
  %1052 = vmatprep.subr.mxu0 0.0
  %1053 = vmatpush1.msra.mxu0 0.0
  %1054 = vmatprep.subr.mxu0 0.0
  %1055 = vmatpush1.msra.mxu0 0.0
  %1056 = vmatprep.subr.mxu0 0.0
  %1057 = vmatpush1.msra.mxu0 0.0
  %1058 = vmatprep.subr.mxu0 0.0
  %1059 = vmatpush1.msra.mxu0 0.0
  %1060 = vmatprep.subr.mxu0 0.0
  %1061 = vmatpush1.msra.mxu0 0.0
  %1062 = vmatprep.subr.mxu0 0.0
  %1063 = vmatpush1.msra.mxu0 0.0
  %1064 = vmatprep.subr.mxu0 0.0
  %1065 = vmatpush1.msra.mxu0 0.0
  %1066 = vmatprep.subr.mxu0 0.0
  %1067 = vmatpush1.msra.mxu0 0.0
  %1068 = vmatprep.subr.mxu0 0.0
  %1069 = vmatpush1.msra.mxu0 0.0
  %1070 = vmatprep.subr.mxu0 0.0
  %1071 = vmatpush1.msra.mxu0 0.0
  %1072 = vmatprep.subr.mxu0 0.0
  %1073 = vmatpush1.msra.mxu0 0.0
  %1074 = vmatprep.subr.mxu0 0.0
  %1075 = vmatpush1.msra.mxu0 0.0
  %1076 = vmatprep.subr.mxu0 0.0
  %1077 = vmatpush1.msra.mxu0 0.0
  %1078 = vmatprep.subr.mxu0 0.0
  %1079 = vmatpush1.msra.mxu0 0.0
  %1080 = vmatprep.subr.mxu0 0.0
  %1081 = vmatpush1.msra.mxu0 0.0
  %1082 = vmatprep.subr.mxu0 0.0
  %1083 = vmatpush1.msra.mxu0 0.0
  %1084 = vmatprep.subr.mxu0 0.0
  %1085 = vmatpush1.msra.mxu0 0.0
  %1086 = vmatprep.subr.mxu0 0.0
  %1087 = vmatpush1.msra.mxu0 0.0
  %1088 = vmatprep.subr.mxu0 0.0
  %1089 = vmatpush1.msra.mxu0 0.0
  %1090 = vmatprep.subr.mxu0 0.0
  %1091 = vmatpush1.msra.mxu0 0.0
  %1092 = vmatprep.subr.mxu0 0.0
  %1093 = vmatpush1.msra.mxu0 0.0
  %1094 = vmatprep.mubr.f32.mxu0 0.0
  %1095 = vmatmul.mubr.f32.gmra.mrb[0].mxu0 %v1028
  %v1096 = vpop.f32.mrb[0].mxu0
  %v1097 = vadd.f32 %v1023, %v1096
  %v1098 = vpop.f32.mrb[0].mxu0
  %1099 = vdwg.mxu0
  %1100 = vst [vmem:[%s5] sm:$0xff] %v1097
  // Predicated region
  $region22: #{my_model_forward.1} parent=0 // pred_check
    _
  $region23: #{my_model_forward.1} parent=0 // pred_check_branch
    %1102 = sbr.rel (0) target = $region25
  $region24: #{my_model_forward.1} parent=0 // pred_region
    _
  $region25: #{my_model_forward.1} parent=0 // pred_fallthru
    _
  // Predicated region
  $region26: #{my_model_forward.1} parent=0 // pred_check
    _
  $region27: #{my_model_forward.1} parent=0 // pred_check_branch
    %1104 = sbr.rel (0) target = $region29
  $region28: #{my_model_forward.1} parent=0 // pred_region
    _
  $region29: #{my_model_forward.1} parent=0 // pred_fallthru
    _

</llo_original>
